<compile_context>
chip_gen: v6e
topology: v6e:2x2x1
jax: 0.10.0
libtpu: 0.0.40
codegen_flags: <defaults>
</compile_context>

<pallas_src>
import functools

import jax
import jax.numpy as jnp
from jax.experimental import pallas as pl
from jax.experimental.pallas import tpu as pltpu


def _round_up(x, m):
    return ((x + m - 1) // m) * m


# ---------------------------------------------------------------------------
# Hardware-aware configuration
# ---------------------------------------------------------------------------
@functools.cache
def _vmem_budget_bytes():
    """Per-core VMEM budget used BOTH for tile sizing and vmem_limit_bytes.

    ~3/4 of the reported per-core capacity: ~96 MiB on v5e/v6e (128 MiB) and
    ~48 MiB on v7x (64 MiB per TensorCore).  Conservative fallback if the
    query fails.
    """
    try:
        cap = int(pltpu.get_tpu_info().vmem_capacity_bytes)
    except Exception:
        cap = 64 * 1024 * 1024            # assume v7x-sized per-core VMEM
    cap = max(cap, 16 * 1024 * 1024)
    return int(min(cap * 3 // 4, 100 * 1024 * 1024))


@functools.cache
def _weight_pipeline_mode_and_bufs():
    """Probe support for pipeline_mode=pl.Buffered(1) on resident blocks.

    Weights use a constant index_map (fetched once); single-buffering them
    halves their reserved VMEM so tile_n can grow.  If the running JAX/Mosaic
    build rejects or mishandles Buffered(1), fall back to default double
    buffering.  Returns (pipeline_mode_or_None, buffers_reserved_per_weight).
    """
    def k(x_ref, c_ref, o_ref):
        o_ref[...] = x_ref[...] + c_ref[...]

    try:
        mode = pl.Buffered(1)
        f = pl.pallas_call(
            k,
            out_shape=jax.ShapeDtypeStruct((16, 128), jnp.float32),
            grid=(2,),
            in_specs=[pl.BlockSpec((8, 128), lambda i: (i, 0)),
                      pl.BlockSpec((8, 128), lambda i: (0, 0),
                                   pipeline_mode=mode)],
            out_specs=pl.BlockSpec((8, 128), lambda i: (i, 0)),
        )
        x = jnp.arange(16 * 128, dtype=jnp.float32).reshape(16, 128)
        c = jnp.full((8, 128), 3.0, jnp.float32)
        out = jax.jit(f)(x, c)
        if bool(jnp.allclose(out, x + 3.0)):
            return mode, 1
    except Exception:
        pass
    return None, 2


def _w_spec(shape, pipeline_mode):
    """BlockSpec for a weight/bias that stays resident across the grid."""
    if pipeline_mode is None:
        return pl.BlockSpec(shape, lambda i: (0, 0))
    return pl.BlockSpec(shape, lambda i: (0, 0), pipeline_mode=pipeline_mode)


def _choose_tile_n(N, *, in_bytes, out_bytes, act_bytes, weight_bytes,
                   weight_bufs, vmem_budget):
    """Largest batch tile that fits the VMEM budget.

    Resident weights occupy `weight_bufs` copies; streamed inputs/outputs are
    double-buffered by the pipeline; activations live once per tile.  Tiles
    >= 256 rows are rounded to a 256 multiple (v6e/v7x MXU geometry), smaller
    tiles to the 8-row sublane granule.
    """
    per_row = 2 * (in_bytes + out_bytes) + act_bytes
    avail = max(vmem_budget - weight_bufs * weight_bytes, 8 * per_row)
    tile = int(avail // per_row)
    n_pad8 = _round_up(N, 8)
    if tile >= n_pad8:
        return n_pad8                      # whole batch in one grid step
    if tile >= 256:
        return (tile // 256) * 256
    return max(8, (tile // 8) * 8)


# ---------------------------------------------------------------------------
# Kernel bodies
# ---------------------------------------------------------------------------
def _mlp4(y, w1_ref, b1_ref, w2_ref, b2_ref, w3_ref, b3_ref, w4_ref, b4_ref):
    """encoder: h1 = relu(y@W1+b1); s = h1@W2+b2
       decoder: h2 = relu(s@W3+b3);  x = h2@W4+b4
    Matmul operands are cast to the weight dtype (bf16 by default);
    accumulation, bias add and ReLU stay in f32."""
    cdt = w1_ref.dtype
    f32 = jnp.float32
    h1 = jnp.maximum(
        jnp.dot(y.astype(cdt), w1_ref[...], preferred_element_type=f32)
        + b1_ref[...].astype(f32), 0.0)
    s = (jnp.dot(h1.astype(cdt), w2_ref[...], preferred_element_type=f32)
         + b2_ref[...].astype(f32))
    h2 = jnp.maximum(
        jnp.dot(s.astype(cdt), w3_ref[...], preferred_element_type=f32)
        + b3_ref[...].astype(f32), 0.0)
    x = (jnp.dot(h2.astype(cdt), w4_ref[...], preferred_element_type=f32)
         + b4_ref[...].astype(f32))
    return s, x


def _fwd_kernel(y_ref, w1_ref, b1_ref, w2_ref, b2_ref, w3_ref, b3_ref,
                w4_ref, b4_ref, s_ref, x_ref):
    """encode -> decode for one batch tile (transform is identity: y_ == x)."""
    y = y_ref[...].astype(jnp.float32)
    s, x = _mlp4(y, w1_ref, b1_ref, w2_ref, b2_ref, w3_ref, b3_ref,
                 w4_ref, b4_ref)
    s_ref[...] = s
    x_ref[...] = x
    # TODO(synk): decoder.transform(x, instrument, z) (LSF convolution +
    # redshift resampling onto instrument.wave_obs) has no module definition
    # here; identity transform is used, so y_ is aliased to x in the wrapper.


def _loss_kernel(y_ref, w_ref, w1_ref, b1_ref, w23_ref, b23_ref, w4_ref,
                 b4_ref, loss_ref):
    """Loss-only path: encode/decode with the latent bottleneck folded
    (W23 = W2@W3, b23 = b2@W3 + b3) and ONLY the per-row weighted MSE written
    back to HBM (no discarded s / x outputs)."""
    cdt = w1_ref.dtype
    f32 = jnp.float32
    y = y_ref[...].astype(f32)
    h1 = jnp.maximum(
        jnp.dot(y.astype(cdt), w1_ref[...], preferred_element_type=f32)
        + b1_ref[...].astype(f32), 0.0)
    h2 = jnp.maximum(
        jnp.dot(h1.astype(cdt), w23_ref[...], preferred_element_type=f32)
        + b23_ref[...].astype(f32), 0.0)
    x = (jnp.dot(h2.astype(cdt), w4_ref[...], preferred_element_type=f32)
         + b4_ref[...].astype(f32))
    d = y - x                               # y_ == x (identity transform)
    w = w_ref[...].astype(f32)
    inv_l = jnp.float32(1.0 / y_ref.shape[1])
    loss_ref[...] = jnp.sum(0.5 * w * d * d, axis=1, keepdims=True) * inv_l


# ---------------------------------------------------------------------------
# Parameter preparation
# ---------------------------------------------------------------------------
def _pad_params_fwd(params, s_pad, param_dtype):
    """Zero-pad the latent dim to a lane-dense width (exact) and cast weight
    matrices (not biases) to the matmul compute dtype."""
    w1, b1, w2, b2, w3, b3, w4, b4 = params
    H, S = w2.shape
    w2p = jnp.zeros((H, s_pad), jnp.float32).at[:, :S].set(w2)
    b2p = jnp.zeros((1, s_pad), jnp.float32).at[:, :S].set(b2)
    w3p = jnp.zeros((s_pad, H), jnp.float32).at[:S, :].set(w3)
    c = lambda a: a.astype(param_dtype)
    return (c(w1), b1, c(w2p), b2p, c(w3p), b3, c(w4), b4)


def _fold_params_loss(params, param_dtype):
    """Fold the two latent matmuls for the loss-only path (s is not returned):
    W23 = W2 @ W3, b23 = b2 @ W3 + b3.  Exact in real arithmetic; the latent
    dim is tiny (S ~ 6) so this is negligible JAX-side work."""
    w1, b1, w2, b2, w3, b3, w4, b4 = params
    hp = jax.lax.Precision.HIGHEST
    w23 = jnp.dot(w2, w3, precision=hp)
    b23 = jnp.dot(b2, w3, precision=hp) + b3
    c = lambda a: a.astype(param_dtype)
    return (c(w1), b1, c(w23), b23, c(w4), b4)


# ---------------------------------------------------------------------------
# Public wrappers (mirror BaseAutoencoder._forward / .loss)
# ---------------------------------------------------------------------------
def base_autoencoder_forward(y, params, *, param_dtype=jnp.bfloat16,
                             tile_n=None, io_dtype=None):
    """Returns (s, x, y_) like BaseAutoencoder._forward (y_ aliases x)."""
    N, L = y.shape
    H = params[0].shape[1]
    S = params[2].shape[1]
    S_pad = _round_up(max(S, 128), 128)

    pmode, wbufs = _weight_pipeline_mode_and_bufs()
    budget = _vmem_budget_bytes()
    pb = jnp.dtype(param_dtype).itemsize
    weight_bytes = pb * (L * H + H * S_pad + S_pad * H + H * L) \
        + 4 * (2 * H + S_pad + L)
    io_b = jnp.dtype(io_dtype).itemsize if io_dtype is not None else y.dtype.itemsize
    if tile_n is None:
        tile_n = _choose_tile_n(
            N, in_bytes=io_b * L, out_bytes=4 * (S_pad + L),
            act_bytes=4 * (2 * H), weight_bytes=weight_bytes,
            weight_bufs=wbufs, vmem_budget=budget)
    N_pad = _round_up(max(N, tile_n), tile_n)

    y_in = y.astype(io_dtype) if io_dtype is not None else y
    if N_pad != N:
        y_in = jnp.zeros((N_pad, L), y_in.dtype).at[:N].set(y_in)
    pp = _pad_params_fwd(params, S_pad, param_dtype)

    row = lambda cols: pl.BlockSpec((tile_n, cols), lambda i: (i, 0))
    in_specs = [row(L),                                      # y
                _w_spec((L, H), pmode), _w_spec((1, H), pmode),
                _w_spec((H, S_pad), pmode), _w_spec((1, S_pad), pmode),
                _w_spec((S_pad, H), pmode), _w_spec((1, H), pmode),
                _w_spec((H, L), pmode), _w_spec((1, L), pmode)]
    out_specs = [row(S_pad), row(L)]                         # s (padded), x

    s_pad_arr, x = pl.pallas_call(
        _fwd_kernel,
        out_shape=(jax.ShapeDtypeStruct((N_pad, S_pad), jnp.float32),
                   jax.ShapeDtypeStruct((N_pad, L), jnp.float32)),
        grid=(N_pad // tile_n,),
        in_specs=in_specs,
        out_specs=out_specs,
        compiler_params=pltpu.CompilerParams(
            dimension_semantics=("parallel",),
            vmem_limit_bytes=budget),
    )(y_in, *pp)

    # Only slice when padding was actually added (avoid extra HBM copy passes).
    s = s_pad_arr[:, :S] if N_pad == N else s_pad_arr[:N, :S]
    x = x if N_pad == N else x[:N]
    return s, x, x    # identity transform: y_ == x, no duplicate writeback


def base_autoencoder_loss(y, w, params, *, individual=False,
                          param_dtype=jnp.bfloat16, tile_n=None,
                          io_dtype=None):
    """Weighted MSE loss matching BaseAutoencoder.loss, fused end-to-end.

    Only the (N, 1) per-row loss leaves the kernel; s / x are never written
    to HBM.  `io_dtype=jnp.bfloat16` additionally halves the y/w read bytes.
    """
    N, L = y.shape
    H = params[0].shape[1]

    pmode, wbufs = _weight_pipeline_mode_and_bufs()
    budget = _vmem_budget_bytes()
    pb = jnp.dtype(param_dtype).itemsize
    weight_bytes = pb * (L * H + H * H + H * L) + 4 * (2 * H + L)
    io_b = jnp.dtype(io_dtype).itemsize if io_dtype is not None else y.dtype.itemsize
    if tile_n is None:
        tile_n = _choose_tile_n(
            N, in_bytes=io_b * 2 * L, out_bytes=4,
            act_bytes=4 * (2 * H + 2 * L), weight_bytes=weight_bytes,
            weight_bufs=wbufs, vmem_budget=budget)
    N_pad = _round_up(max(N, tile_n), tile_n)

    y_in = y.astype(io_dtype) if io_dtype is not None else y
    w_in = w.astype(io_dtype) if io_dtype is not None else w
    if N_pad != N:
        # Zero-padded w rows make padded rows contribute exactly zero loss.
        y_in = jnp.zeros((N_pad, L), y_in.dtype).at[:N].set(y_in)
        w_in = jnp.zeros((N_pad, L), w_in.dtype).at[:N].set(w_in)
    fp = _fold_params_loss(params, param_dtype)

    row = lambda cols: pl.BlockSpec((tile_n, cols), lambda i: (i, 0))
    in_specs = [row(L), row(L),                              # y, w
                _w_spec((L, H), pmode), _w_spec((1, H), pmode),
                _w_spec((H, H), pmode), _w_spec((1, H), pmode),
                _w_spec((H, L), pmode), _w_spec((1, L), pmode)]

    loss_row = pl.pallas_call(
        _loss_kernel,
        out_shape=jax.ShapeDtypeStruct((N_pad, 1), jnp.float32),
        grid=(N_pad // tile_n,),
        in_specs=in_specs,
        out_specs=row(1),
        compiler_params=pltpu.CompilerParams(
            dimension_semantics=("parallel",),
            vmem_limit_bytes=budget),
    )(y_in, w_in, *fp)

    loss_ind = loss_row[:, 0] if N_pad == N else loss_row[:N, 0]
    if individual:
        return loss_ind
    return jnp.sum(loss_ind)


# ---------------------------------------------------------------------------
# Deterministic parameter construction (PyTorch nn.Linear style init)
# ---------------------------------------------------------------------------
def _linear_init(key, fan_in, fan_out):
    kw, kb = jax.random.split(key)
    bound = 1.0 / jnp.sqrt(jnp.float32(fan_in))
    w = jax.random.uniform(kw, (fan_in, fan_out), jnp.float32, -bound, bound)
    b = jax.random.uniform(kb, (1, fan_out), jnp.float32, -bound, bound)
    return w, b


def make_params(key, L, hidden, n_latent):
    k1, k2, k3, k4 = jax.random.split(key, 4)
    w1, b1 = _linear_init(k1, L, hidden)         # encoder layer 1
    w2, b2 = _linear_init(k2, hidden, n_latent)  # encoder layer 2 -> latents
    w3, b3 = _linear_init(k3, n_latent, hidden)  # decoder layer 1
    w4, b4 = _linear_init(k4, hidden, L)         # decoder layer 2 -> spectrum
    return (w1, b1, w2, b2, w3, b3, w4, b4)


# ---------------------------------------------------------------------------
# Main
# ---------------------------------------------------------------------------
if __name__ == "__main__":
    N, L, HIDDEN, N_LATENT = 8, 128, 128, 6

    key = jax.random.PRNGKey(0)
    k_params, k_y, k_w = jax.random.split(key, 3)
    params = make_params(k_params, L, HIDDEN, N_LATENT)
    y = jax.random.normal(k_y, (N, L), jnp.float32)              # observed spectra
    w = jax.random.uniform(k_w, (N, L), jnp.float32, 0.5, 1.5)   # inverse-variance weights

    # Plain-JAX reference at full f32 precision.
    (w1, b1, w2, b2, w3, b3, w4, b4) = params
    hp = jax.lax.Precision.HIGHEST
    h1 = jnp.maximum(jnp.dot(y, w1, precision=hp) + b1, 0.0)
    s_ref = jnp.dot(h1, w2, precision=hp) + b2
    h2 = jnp.maximum(jnp.dot(s_ref, w3, precision=hp) + b3, 0.0)
    x_ref = jnp.dot(h2, w4, precision=hp) + b4
    loss_ind_ref = jnp.sum(0.5 * w * (y - x_ref) ** 2, axis=1) / L
    loss_ref = jnp.sum(loss_ind_ref)

    # (1) f32-weight path.  Tolerances cover MXU f32-pass decomposition
    # differences vs the HIGHEST-precision XLA reference.
    s, x, y_rec = base_autoencoder_forward(y, params, param_dtype=jnp.float32)
    loss = base_autoencoder_loss(y, w, params, param_dtype=jnp.float32)
    loss_ind = base_autoencoder_loss(y, w, params, individual=True,
                                     param_dtype=jnp.float32)
    jax.block_until_ready((s, x, y_rec, loss, loss_ind))
    assert s.shape == (N, N_LATENT) and x.shape == (N, L)
    assert loss_ind.shape == (N,)
    assert jnp.allclose(s, s_ref, atol=5e-2, rtol=5e-2)
    assert jnp.allclose(x, x_ref, atol=5e-2, rtol=5e-2)
    assert jnp.allclose(y_rec, x_ref, atol=5e-2, rtol=5e-2)
    assert jnp.allclose(loss_ind, loss_ind_ref, atol=5e-2, rtol=5e-2)
    assert jnp.allclose(loss, loss_ref, atol=5e-2, rtol=5e-2)
    # Loss kernel (folded W2@W3, loss-only outputs) vs the forward kernel's
    # own reconstruction -- checks the weighted-MSE wiring tightly.
    loss_ind_from_fwd = jnp.sum(0.5 * w * (y - x) ** 2, axis=1) / L
    assert jnp.allclose(loss_ind, loss_ind_from_fwd, atol=1e-3, rtol=2e-2)

    # (2) Default fast path: bf16 matmul operands (f32 accumulation) and
    # bf16 y/w at the loss kernel boundary.  Looser tolerances vs f32 ref.
    s_b, x_b, _ = base_autoencoder_forward(y, params)
    loss_b = base_autoencoder_loss(y, w, params, io_dtype=jnp.bfloat16)
    jax.block_until_ready((s_b, x_b, loss_b))
    assert bool(jnp.all(jnp.isfinite(x_b))) and bool(jnp.isfinite(loss_b))
    assert jnp.allclose(x_b, x_ref, atol=1e-1, rtol=1e-1)
    assert jnp.allclose(loss_b, loss_ref, atol=1e-1, rtol=1e-1)

    print("KERNEL_OK")
</pallas_src>

<mosaic_0001>
module attributes {stable_mosaic.version = 11 : i64} {
  func.func @k(%arg0: i32, %arg1: memref<8x128xf32, #tpu.memory_space<vmem>>, %arg2: memref<8x128xf32, #tpu.memory_space<vmem>>, %arg3: memref<8x128xf32, #tpu.memory_space<vmem>>) attributes {dimension_semantics = [#tpu.dimension_semantics<arbitrary>], iteration_bounds = array<i64: 2>, scalar_prefetch = 0 : i64, scratch_operands = 0 : i64, tpu.core_type = #tpu.core_type<tc>, window_params = [{transform_indices = @transform_0, window_bounds = array<i64: 8, 128>}, {pipeline_mode = #tpu.pipeline_mode<synchronous>, transform_indices = @transform_1, window_bounds = array<i64: 8, 128>}, {transform_indices = @transform_2, window_bounds = array<i64: 8, 128>}]} {
    %c0 = arith.constant 0 : index
    %c0_0 = arith.constant 0 : index
    %0 = vector.load %arg1[%c0, %c0_0] : memref<8x128xf32, #tpu.memory_space<vmem>>, vector<8x128xf32>
    %c0_1 = arith.constant 0 : index
    %c0_2 = arith.constant 0 : index
    %1 = vector.load %arg2[%c0_1, %c0_2] : memref<8x128xf32, #tpu.memory_space<vmem>>, vector<8x128xf32>
    %2 = arith.addf %0, %1 : vector<8x128xf32>
    %c0_3 = arith.constant 0 : index
    %c0_4 = arith.constant 0 : index
    %3 = vector.load %arg3[%c0_3, %c0_4] : memref<8x128xf32, #tpu.memory_space<vmem>>, vector<8x128xf32>
    tpu.vector_store %arg3[%c0_3, %c0_4], %2 {strides = array<i32>} : memref<8x128xf32, #tpu.memory_space<vmem>>, vector<8x128xf32>,
    return
  }
  func.func @transform_0(%arg0: i32) -> (i32, i32) {
    %c0_i32 = arith.constant 0 : i32
    %c0_i32_0 = arith.constant 0 : i32
    return %arg0, %c0_i32 : i32, i32
  }
  func.func @transform_1(%arg0: i32) -> (i32, i32) {
    %c0_i32 = arith.constant 0 : i32
    %c0_i32_0 = arith.constant 0 : i32
    %c0_i32_1 = arith.constant 0 : i32
    return %c0_i32, %c0_i32_0 : i32, i32
  }
  func.func @transform_2(%arg0: i32) -> (i32, i32) {
    %c0_i32 = arith.constant 0 : i32
    %c0_i32_0 = arith.constant 0 : i32
    return %arg0, %c0_i32 : i32, i32
  }
}

module attributes {stable_mosaic.version = 11 : i64} {
  func.func @_fwd_kernel(%arg0: i32, %arg1: memref<8x128xf32, #tpu.memory_space<vmem>>, %arg2: memref<128x128xf32, #tpu.memory_space<vmem>>, %arg3: memref<1x128xf32, #tpu.memory_space<vmem>>, %arg4: memref<128x128xf32, #tpu.memory_space<vmem>>, %arg5: memref<1x128xf32, #tpu.memory_space<vmem>>, %arg6: memref<128x128xf32, #tpu.memory_space<vmem>>, %arg7: memref<1x128xf32, #tpu.memory_space<vmem>>, %arg8: memref<128x128xf32, #tpu.memory_space<vmem>>, %arg9: memref<1x128xf32, #tpu.memory_space<vmem>>, %arg10: memref<8x128xf32, #tpu.memory_space<vmem>>, %arg11: memref<8x128xf32, #tpu.memory_space<vmem>>) attributes {dimension_semantics = [#tpu.dimension_semantics<parallel>], iteration_bounds = array<i64: 1>, scalar_prefetch = 0 : i64, scratch_operands = 0 : i64, tpu.core_type = #tpu.core_type<tc>, window_params = [{transform_indices = @transform_0, window_bounds = array<i64: 8, 128>}, {pipeline_mode = #tpu.pipeline_mode<synchronous>, transform_indices = @transform_1, window_bounds = array<i64: 128, 128>}, {pipeline_mode = #tpu.pipeline_mode<synchronous>, transform_indices = @transform_2, window_bounds = array<i64: 1, 128>}, {pipeline_mode = #tpu.pipeline_mode<synchronous>, transform_indices = @transform_3, window_bounds = array<i64: 128, 128>}, {pipeline_mode = #tpu.pipeline_mode<synchronous>, transform_indices = @transform_4, window_bounds = array<i64: 1, 128>}, {pipeline_mode = #tpu.pipeline_mode<synchronous>, transform_indices = @transform_5, window_bounds = array<i64: 128, 128>}, {pipeline_mode = #tpu.pipeline_mode<synchronous>, transform_indices = @transform_6, window_bounds = array<i64: 1, 128>}, {pipeline_mode = #tpu.pipeline_mode<synchronous>, transform_indices = @transform_7, window_bounds = array<i64: 128, 128>}, {pipeline_mode = #tpu.pipeline_mode<synchronous>, transform_indices = @transform_8, window_bounds = array<i64: 1, 128>}, {transform_indices = @transform_9, window_bounds = array<i64: 8, 128>}, {transform_indices = @transform_10, window_bounds = array<i64: 8, 128>}]} {
    %c0 = arith.constant 0 : index
    %c0_0 = arith.constant 0 : index
    %0 = vector.load %arg1[%c0, %c0_0] : memref<8x128xf32, #tpu.memory_space<vmem>>, vector<8x128xf32>
    %c0_1 = arith.constant 0 : index
    %c0_2 = arith.constant 0 : index
    %1 = vector.load %arg2[%c0_1, %c0_2] : memref<128x128xf32, #tpu.memory_space<vmem>>, vector<128x128xf32>
    %cst = arith.constant dense<0.000000e+00> : vector<8x128xf32>
    %2 = tpu.matmul %0, %1, %cst {dimension_numbers = #tpu.dot_dimension_numbers<[1], [0], [0], [1], [0, 0, 1, 1], [], []>} : vector<8x128xf32>, vector<128x128xf32>, vector<8x128xf32> -> vector<8x128xf32>
    %c0_3 = arith.constant 0 : index
    %c0_4 = arith.constant 0 : index
    %3 = vector.load %arg3[%c0_3, %c0_4] : memref<1x128xf32, #tpu.memory_space<vmem>>, vector<1x128xf32>
    %4 = vector.broadcast %3 : vector<1x128xf32> to vector<8x128xf32>
    %5 = arith.addf %2, %4 : vector<8x128xf32>
    %cst_5 = arith.constant 0.000000e+00 : f32
    %6 = vector.broadcast %cst_5 : f32 to vector<8x128xf32>
    %7 = arith.maximumf %5, %6 : vector<8x128xf32>
    %c0_6 = arith.constant 0 : index
    %c0_7 = arith.constant 0 : index
    %8 = vector.load %arg4[%c0_6, %c0_7] : memref<128x128xf32, #tpu.memory_space<vmem>>, vector<128x128xf32>
    %cst_8 = arith.constant dense<0.000000e+00> : vector<8x128xf32>
    %9 = tpu.matmul %7, %8, %cst_8 {dimension_numbers = #tpu.dot_dimension_numbers<[1], [0], [0], [1], [0, 0, 1, 1], [], []>} : vector<8x128xf32>, vector<128x128xf32>, vector<8x128xf32> -> vector<8x128xf32>
    %c0_9 = arith.constant 0 : index
    %c0_10 = arith.constant 0 : index
    %10 = vector.load %arg5[%c0_9, %c0_10] : memref<1x128xf32, #tpu.memory_space<vmem>>, vector<1x128xf32>
    %11 = vector.broadcast %10 : vector<1x128xf32> to vector<8x128xf32>
    %12 = arith.addf %9, %11 : vector<8x128xf32>
    %c0_11 = arith.constant 0 : index
    %c0_12 = arith.constant 0 : index
    %13 = vector.load %arg6[%c0_11, %c0_12] : memref<128x128xf32, #tpu.memory_space<vmem>>, vector<128x128xf32>
    %cst_13 = arith.constant dense<0.000000e+00> : vector<8x128xf32>
    %14 = tpu.matmul %12, %13, %cst_13 {dimension_numbers = #tpu.dot_dimension_numbers<[1], [0], [0], [1], [0, 0, 1, 1], [], []>} : vector<8x128xf32>, vector<128x128xf32>, vector<8x128xf32> -> vector<8x128xf32>
    %c0_14 = arith.constant 0 : index
    %c0_15 = arith.constant 0 : index
    %15 = vector.load %arg7[%c0_14, %c0_15] : memref<1x128xf32, #tpu.memory_space<vmem>>, vector<1x128xf32>
    %16 = vector.broadcast %15 : vector<1x128xf32> to vector<8x128xf32>
    %17 = arith.addf %14, %16 : vector<8x128xf32>
    %cst_16 = arith.constant 0.000000e+00 : f32
    %18 = vector.broadcast %cst_16 : f32 to vector<8x128xf32>
    %19 = arith.maximumf %17, %18 : vector<8x128xf32>
    %c0_17 = arith.constant 0 : index
    %c0_18 = arith.constant 0 : index
    %20 = vector.load %arg8[%c0_17, %c0_18] : memref<128x128xf32, #tpu.memory_space<vmem>>, vector<128x128xf32>
    %cst_19 = arith.constant dense<0.000000e+00> : vector<8x128xf32>
    %21 = tpu.matmul %19, %20, %cst_19 {dimension_numbers = #tpu.dot_dimension_numbers<[1], [0], [0], [1], [0, 0, 1, 1], [], []>} : vector<8x128xf32>, vector<128x128xf32>, vector<8x128xf32> -> vector<8x128xf32>
    %c0_20 = arith.constant 0 : index
    %c0_21 = arith.constant 0 : index
    %22 = vector.load %arg9[%c0_20, %c0_21] : memref<1x128xf32, #tpu.memory_space<vmem>>, vector<1x128xf32>
    %23 = vector.broadcast %22 : vector<1x128xf32> to vector<8x128xf32>
    %24 = arith.addf %21, %23 : vector<8x128xf32>
    %c0_22 = arith.constant 0 : index
    %c0_23 = arith.constant 0 : index
    %25 = vector.load %arg10[%c0_22, %c0_23] : memref<8x128xf32, #tpu.memory_space<vmem>>, vector<8x128xf32>
    tpu.vector_store %arg10[%c0_22, %c0_23], %12 {strides = array<i32>} : memref<8x128xf32, #tpu.memory_space<vmem>>, vector<8x128xf32>,
    %c0_24 = arith.constant 0 : index
    %c0_25 = arith.constant 0 : index
    %26 = vector.load %arg11[%c0_24, %c0_25] : memref<8x128xf32, #tpu.memory_space<vmem>>, vector<8x128xf32>
    tpu.vector_store %arg11[%c0_24, %c0_25], %24 {strides = array<i32>} : memref<8x128xf32, #tpu.memory_space<vmem>>, vector<8x128xf32>,
    return
  }
  func.func @transform_0(%arg0: i32) -> (i32, i32) {
    %c0_i32 = arith.constant 0 : i32
    %c0_i32_0 = arith.constant 0 : i32
    return %arg0, %c0_i32 : i32, i32
  }
  func.func @transform_1(%arg0: i32) -> (i32, i32) {
    %c0_i32 = arith.constant 0 : i32
    %c0_i32_0 = arith.constant 0 : i32
    %c0_i32_1 = arith.constant 0 : i32
    return %c0_i32, %c0_i32_0 : i32, i32
  }
  func.func @transform_2(%arg0: i32) -> (i32, i32) {
    %c0_i32 = arith.constant 0 : i32
    %c0_i32_0 = arith.constant 0 : i32
    %c0_i32_1 = arith.constant 0 : i32
    return %c0_i32, %c0_i32_0 : i32, i32
  }
  func.func @transform_3(%arg0: i32) -> (i32, i32) {
    %c0_i32 = arith.constant 0 : i32
    %c0_i32_0 = arith.constant 0 : i32
    %c0_i32_1 = arith.constant 0 : i32
    return %c0_i32, %c0_i32_0 : i32, i32
  }
  func.func @transform_4(%arg0: i32) -> (i32, i32) {
    %c0_i32 = arith.constant 0 : i32
    %c0_i32_0 = arith.constant 0 : i32
    %c0_i32_1 = arith.constant 0 : i32
    return %c0_i32, %c0_i32_0 : i32, i32
  }
  func.func @transform_5(%arg0: i32) -> (i32, i32) {
    %c0_i32 = arith.constant 0 : i32
    %c0_i32_0 = arith.constant 0 : i32
    %c0_i32_1 = arith.constant 0 : i32
    return %c0_i32, %c0_i32_0 : i32, i32
  }
  func.func @transform_6(%arg0: i32) -> (i32, i32) {
    %c0_i32 = arith.constant 0 : i32
    %c0_i32_0 = arith.constant 0 : i32
    %c0_i32_1 = arith.constant 0 : i32
    return %c0_i32, %c0_i32_0 : i32, i32
  }
  func.func @transform_7(%arg0: i32) -> (i32, i32) {
    %c0_i32 = arith.constant 0 : i32
    %c0_i32_0 = arith.constant 0 : i32
    %c0_i32_1 = arith.constant 0 : i32
    return %c0_i32, %c0_i32_0 : i32, i32
  }
  func.func @transform_8(%arg0: i32) -> (i32, i32) {
    %c0_i32 = arith.constant 0 : i32
    %c0_i32_0 = arith.constant 0 : i32
    %c0_i32_1 = arith.constant 0 : i32
    return %c0_i32, %c0_i32_0 : i32, i32
  }
  func.func @transform_9(%arg0: i32) -> (i32, i32) {
    %c0_i32 = arith.constant 0 : i32
    %c0_i32_0 = arith.constant 0 : i32
    return %arg0, %c0_i32 : i32, i32
  }
  func.func @transform_10(%arg0: i32) -> (i32, i32) {
    %c0_i32 = arith.constant 0 : i32
    %c0_i32_0 = arith.constant 0 : i32
    return %arg0, %c0_i32 : i32, i32
  }
}

</mosaic_0001>

<llo_original>
// kernel: tpu_custom_call.1
$region0: #{tpu_custom_call.1}
  #allocation0 [shape = 'u32[]', space=smem, size = 0x4, offset = 0x4, fixed_abs, tag = 'smem constant byte address 0x4 - core index']
  #allocation1 [shape = 'u32[144,128]{1,0:T(1,128)}', space=vmem, size = 0x12000, scoped, tag = 'internal scratch']
  %s0 = inlined_call_operand.hbm [shape: f32[16,128], index: 0, kind: input, shape index: {}]
  %s1 = inlined_call_operand.hbm [shape: f32[8,128], index: 1, kind: input, shape index: {}]
  %s2 = inlined_call_operand.hbm [shape: f32[16,128], index: 2, kind: output, shape index: {}]
  %s3 = sld [smem:[#allocation0]]
  $region49: #{tpu_custom_call.1} parent=0
    _
  %s5 = ssub.s32 1, %s3
  %s6 = scalar_select 0, %s5, %s3
  $region1: #{tpu_custom_call.1} parent=0
    #allocation2 [shape = 'u8[8192]{0}', space=vmem, size = 0x2000, scoped, tag = 'input window, operand 0']
    #allocation3 [shape = 's32[2]{0}', space=sflag, size = 0x8, scoped, tag = 'scoped memory for tpu_custom_call.1']
    #allocation4 [shape = 's32[2]{0}', space=sflag, size = 0x8, scoped, tag = 'scoped memory for tpu_custom_call.1']
    #allocation5 [shape = 'u8[4096]{0}', space=vmem, size = 0x1000, scoped, tag = 'input window, operand 1, single buffered']
    #allocation6 [shape = 's32[1]{0}', space=sflag, size = 0x4, scoped, tag = 'scoped memory for tpu_custom_call.1']
    #allocation7 [shape = 'u8[8192]{0}', space=vmem, size = 0x2000, scoped, tag = 'output window, operand 0']
    %7 = vsyncpa [#allocation3], 0
    %s8 = scalar_lea.sflag [#allocation3], 1
    %9 = vsyncpa %s8, 0
    %10 = vsyncpa [#allocation6], 0
    %11 = vsyncpa [#allocation4], 0
    %s12 = scalar_lea.sflag [#allocation4], 1
    %13 = vsyncpa %s12, 0
    loop: start=0, step=1, limit=4
    $region2: #{tpu_custom_call.1} parent=1 // loop_pre_header
      _
    $region3: #{tpu_custom_call.1} parent=1 // loop_header
      %s15 = sphi 0, %s19
      %p16 = scmp.ge.s32.totalorder %s15, 4
      %s25 = sphi 0, %s27
      %s28 = sphi 0, %s25
      %s29 = sphi 0, %s28
      %s45 = sphi 0, %s29
      %s49 = sphi 0, %s49
      %s51 = sphi 0, %s49
      %s52 = sphi 0, %s51
      %s66 = sphi 0, %s52
      %s72 = sphi 0, %s74
      %s75 = sphi 0, %s72
      %s76 = sphi 0, %s75
      %s92 = sphi 0, %s76
    $region4: #{tpu_custom_call.1} parent=1 // loop_header_branch
      %18 = sbr.rel (%p16) target = $region8
    $region5: #{tpu_custom_call.1} parent=1 // loop_body
      %s20 = ssub.s32 %s15, 1
      %s21 = ssub.s32 %s15, 2
      %s22 = sadd.s32 %s15, 1
      %s23 = ssub.s32 %s15, %s22
      %p24 = scmp.eq.s32.totalorder %s23, 0
      %s26 = sadd.s32 %s25, 1
      %s27 = scalar_select %p24, %s25, %s26
      %p30 = pneg %p24
      %p31 = scmp.eq.s32.totalorder %s15, 1
      %p32 = por %p30, %p31
      %p33 = scmp.ne.s32.totalorder %s25, %s28
      %p34 = scmp.eq.s32.totalorder %s15, 0
      %p35 = por %p33, %p34
      %p36 = scmp.ne.s32.totalorder %s25, %s28
      %p37 = scmp.eq.s32.totalorder %s20, 1
      %p38 = por %p36, %p37
      %p39 = scmp.ne.s32.totalorder %s28, %s29
      %p40 = scmp.eq.s32.totalorder %s20, 0
      %p41 = por %p39, %p40
      %p42 = scmp.ne.s32.totalorder %s28, %s29
      %p43 = scmp.eq.s32.totalorder %s21, 1
      %p44 = por %p42, %p43
      %p46 = scmp.ne.s32.totalorder %s29, %s45
      %p47 = scmp.eq.s32.totalorder %s21, 0
      %p48 = por %p46, %p47
      %s50 = sadd.s32 %s49, 1
      %p53 = scmp.eq.s32.totalorder %s15, 1
      %p54 = scmp.ne.s32.totalorder %s49, %s51
      %p55 = scmp.eq.s32.totalorder %s15, 0
      %p56 = por %p54, %p55
      %p57 = scmp.ne.s32.totalorder %s49, %s51
      %p58 = scmp.eq.s32.totalorder %s20, 1
      %p59 = por %p57, %p58
      %p60 = scmp.ne.s32.totalorder %s51, %s52
      %p61 = scmp.eq.s32.totalorder %s20, 0
      %p62 = por %p60, %p61
      %p63 = scmp.ne.s32.totalorder %s51, %s52
      %p64 = scmp.eq.s32.totalorder %s21, 1
      %p65 = por %p63, %p64
      %p67 = scmp.ne.s32.totalorder %s52, %s66
      %p68 = scmp.eq.s32.totalorder %s21, 0
      %p69 = por %p67, %p68
      %s70 = ssub.s32 %s15, %s22
      %p71 = scmp.eq.s32.totalorder %s70, 0
      %s73 = sadd.s32 %s72, 1
      %s74 = scalar_select %p71, %s72, %s73
      %p77 = pneg %p71
      %p78 = scmp.eq.s32.totalorder %s15, 1
      %p79 = por %p77, %p78
      %p80 = scmp.ne.s32.totalorder %s72, %s75
      %p81 = scmp.eq.s32.totalorder %s15, 0
      %p82 = por %p80, %p81
      %p83 = scmp.ne.s32.totalorder %s72, %s75
      %p84 = scmp.eq.s32.totalorder %s20, 1
      %p85 = por %p83, %p84
      %p86 = scmp.ne.s32.totalorder %s75, %s76
      %p87 = scmp.eq.s32.totalorder %s20, 0
      %p88 = por %p86, %p87
      %p89 = scmp.ne.s32.totalorder %s75, %s76
      %p90 = scmp.eq.s32.totalorder %s21, 1
      %p91 = por %p89, %p90
      %p93 = scmp.ne.s32.totalorder %s76, %s92
      %p94 = scmp.eq.s32.totalorder %s21, 0
      %p95 = por %p93, %p94
      %p96 = scmp.le.s32.totalorder 1, %s15
      %p97 = scmp.lt.s32.totalorder %s15, 3
      %p98 = pnand %p96, %p97
      %p99 = pneg %p98
      // Predicated region
      $region9: #{tpu_custom_call.1} parent=5 // pred_check
        _
      $region10: #{tpu_custom_call.1} parent=5 // pred_check_branch
        %101 = sbr.rel (%p98) target = $region12
      $region11: #{tpu_custom_call.1} parent=5 // pred_region
        %s102 = ssub.s32 %s15, 1
        // Predicated region
        $region13: #{tpu_custom_call.1} parent=11 // pred_check
          %p103 = pneg %p62
        $region14: #{tpu_custom_call.1} parent=11 // pred_check_branch
          %105 = sbr.rel (%p103) target = $region16
        $region15: #{tpu_custom_call.1} parent=11 // pred_region
          %s107 = ssub.s32 128, 128
          %108 = vsyncadd [#allocation6], %s107
          %s110 = sshll.u32 [#allocation5], 4
          %s111 = int_to_ptr.vmem [resolvable:$true] %s110
          %113 = dma.hbm_to_vmem [thread:$0]  %s1, 128, %s111, [#allocation6]
        $region16: #{tpu_custom_call.1} parent=11 // pred_fallthru
          _
      $region12: #{tpu_custom_call.1} parent=5 // pred_fallthru
        _
      %p114 = scmp.lt.s32.totalorder %s15, 2
      // Predicated region
      $region17: #{tpu_custom_call.1} parent=5 // pred_check
        %p115 = pneg %p114
      $region18: #{tpu_custom_call.1} parent=5 // pred_check_branch
        %117 = sbr.rel (%p115) target = $region20
      $region19: #{tpu_custom_call.1} parent=5 // pred_region
        // Predicated region
        $region21: #{tpu_custom_call.1} parent=19 // pred_check
          %p118 = pneg %p35
        $region22: #{tpu_custom_call.1} parent=19 // pred_check_branch
          %120 = sbr.rel (%p118) target = $region24
        $region23: #{tpu_custom_call.1} parent=19 // pred_region
          %s121 = sand.u32 %s25, 1
          %s122 = scalar_lea.sflag [#allocation3], %s121
          %s123 = sand.u32 %s25, 1
          %s124 = smul.addr %s123, 8
          %s125 = scalar_lea.vmem [#allocation2], %s124
          %s127 = ssub.s32 128, 128
          %128 = vsyncadd %s122, %s127
          %s129 = smul.addr %s15, 128
          %s130 = scalar_lea.hbm %s0, %s129
          %s132 = sshll.u32 %s125, 4
          %s133 = int_to_ptr.vmem [resolvable:$true] %s132
          %135 = dma.hbm_to_vmem [thread:$0]  %s130, 128, %s133, %s122
        $region24: #{tpu_custom_call.1} parent=19 // pred_fallthru
          _
      $region20: #{tpu_custom_call.1} parent=5 // pred_fallthru
        _
      %p136 = scmp.le.s32.totalorder 1, %s15
      %p137 = scmp.lt.s32.totalorder %s15, 3
      %p138 = pnand %p136, %p137
      %p139 = pneg %p138
      // Predicated region
      $region25: #{tpu_custom_call.1} parent=5 // pred_check
        _
      $region26: #{tpu_custom_call.1} parent=5 // pred_check_branch
        %141 = sbr.rel (%p138) target = $region28
      $region27: #{tpu_custom_call.1} parent=5 // pred_region
        %s142 = ssub.s32 %s15, 1
        %s143 = sand.u32 %s28, 1
        %s144 = scalar_lea.sflag [#allocation3], %s143
        %s145 = sand.u32 %s28, 1
        %s146 = smul.addr %s145, 8
        %s147 = scalar_lea.vmem [#allocation2], %s146
        // Predicated region
        $region29: #{tpu_custom_call.1} parent=27 // pred_check
          %p148 = pneg %p41
        $region30: #{tpu_custom_call.1} parent=27 // pred_check_branch
          %150 = sbr.rel (%p148) target = $region32
        $region31: #{tpu_custom_call.1} parent=27 // pred_region
          %151 = dma.done %s144, 128
        $region32: #{tpu_custom_call.1} parent=27 // pred_fallthru
          _
        // Predicated region
        $region33: #{tpu_custom_call.1} parent=27 // pred_check
          %p152 = pneg %p62
        $region34: #{tpu_custom_call.1} parent=27 // pred_check_branch
          %154 = sbr.rel (%p152) target = $region36
        $region35: #{tpu_custom_call.1} parent=27 // pred_region
          %155 = dma.done [#allocation6], 128
        $region36: #{tpu_custom_call.1} parent=27 // pred_fallthru
          _
        %s156 = sand.u32 %s28, 1
        %s157 = scalar_lea.sflag [#allocation3], %s156
        %s158 = sand.u32 %s28, 1
        %s159 = smul.addr %s158, 8
        %s160 = scalar_lea.vmem [#allocation2], %s159
        %p161 = pneg %p41
        %p162 = pneg %p38
        %p163 = pneg %p62
        %p164 = pneg %p59
        %p165 = pneg %p88
        %p166 = pneg %p85
        %s167 = sand.u32 %s75, 1
        %s168 = scalar_lea.sflag [#allocation4], %s167
        %s169 = sand.u32 %s75, 1
        %s170 = smul.addr %s169, 8
        %s171 = scalar_lea.vmem [#allocation7], %s170
        %v172 = vld [vmem:[%s147] sm:$0xff]
        %v173 = vld [vmem:[#allocation5] sm:$0xff]
        %v174 = vadd.f32 %v172, %v173
        %175 = vst [vmem:[%s171] sm:$0xff] %v174
        %s176 = sand.u32 %s75, 1
        %s177 = scalar_lea.sflag [#allocation4], %s176
        %s178 = sand.u32 %s75, 1
        %s179 = smul.addr %s178, 8
        %s180 = scalar_lea.vmem [#allocation7], %s179
        // Predicated region
        $region37: #{tpu_custom_call.1} parent=27 // pred_check
          %p181 = pneg %p85
        $region38: #{tpu_custom_call.1} parent=27 // pred_check_branch
          %183 = sbr.rel (%p181) target = $region40
        $region39: #{tpu_custom_call.1} parent=27 // pred_region
          %s185 = ssub.s32 128, 128
          %186 = vsyncadd %s177, %s185
          %s187 = smul.addr %s20, 128
          %s188 = scalar_lea.hbm %s2, %s187
          %s190 = sshll.u32 %s180, 4
          %s191 = int_to_ptr.vmem [resolvable:$true] %s190
          %193 = dma.vmem_to_hbm [thread:$0]  %s191, 128, %s188, %s177
        $region40: #{tpu_custom_call.1} parent=27 // pred_fallthru
          _
      $region28: #{tpu_custom_call.1} parent=5 // pred_fallthru
        _
      %p194 = scmp.le.s32.totalorder 2, %s15
      // Predicated region
      $region41: #{tpu_custom_call.1} parent=5 // pred_check
        %p195 = pneg %p194
      $region42: #{tpu_custom_call.1} parent=5 // pred_check_branch
        %197 = sbr.rel (%p195) target = $region44
      $region43: #{tpu_custom_call.1} parent=5 // pred_region
        %s198 = ssub.s32 %s15, 2
        // Predicated region
        $region45: #{tpu_custom_call.1} parent=43 // pred_check
          %p199 = pneg %p91
        $region46: #{tpu_custom_call.1} parent=43 // pred_check_branch
          %201 = sbr.rel (%p199) target = $region48
        $region47: #{tpu_custom_call.1} parent=43 // pred_region
          %s202 = sand.u32 %s76, 1
          %s203 = scalar_lea.sflag [#allocation4], %s202
          %s204 = sand.u32 %s76, 1
          %s205 = smul.addr %s204, 8
          %s206 = scalar_lea.vmem [#allocation7], %s205
          %207 = dma.done %s203, 128
        $region48: #{tpu_custom_call.1} parent=43 // pred_fallthru
          _
      $region44: #{tpu_custom_call.1} parent=5 // pred_fallthru
        _
    $region6: #{tpu_custom_call.1} parent=1 // loop_footer
      %s19 = sadd.s32 1, %s15
    $region7: #{tpu_custom_call.1} parent=1 // loop_footer_branch
      %14 = sbr.rel target = $region3
    $region8: #{tpu_custom_call.1} parent=1 // loop_exit
      _
    %208 = vsyncpa [#allocation3], 1
    %s209 = scalar_lea.sflag [#allocation3], 1
    %210 = vsyncpa %s209, 1
    %211 = vsyncpa [#allocation6], 1
    %212 = vsyncpa [#allocation4], 1
    %s213 = scalar_lea.sflag [#allocation4], 1
    %214 = vsyncpa %s213, 1

// kernel: tpu_custom_call.1
$region0: #{tpu_custom_call.1}
  #allocation0 [shape = 'u32[]', space=smem, size = 0x4, offset = 0x4, fixed_abs, tag = 'smem constant byte address 0x4 - core index']
  #allocation1 [shape = 'u32[144,128]{1,0:T(1,128)}', space=vmem, size = 0x12000, scoped, tag = 'internal scratch']
  %s0 = inlined_call_operand.hbm [shape: f32[8,128], index: 0, kind: input, shape index: {}]
  %s1 = inlined_call_operand.hbm [shape: f32[128,128], index: 1, kind: input, shape index: {}]
  %s2 = inlined_call_operand.vmem [shape: f32[1,128], index: 2, kind: input, shape index: {}]
  %s3 = inlined_call_operand.hbm [shape: f32[128,128], index: 3, kind: input, shape index: {}]
  %s4 = inlined_call_operand.vmem [shape: f32[1,128], index: 4, kind: input, shape index: {}]
  %s5 = inlined_call_operand.hbm [shape: f32[128,128], index: 5, kind: input, shape index: {}]
  %s6 = inlined_call_operand.vmem [shape: f32[1,128], index: 6, kind: input, shape index: {}]
  %s7 = inlined_call_operand.hbm [shape: f32[128,128], index: 7, kind: input, shape index: {}]
  %s8 = inlined_call_operand.vmem [shape: f32[1,128], index: 8, kind: input, shape index: {}]
  %s9 = inlined_call_operand.hbm [shape: f32[8,128], index: 9, kind: output, shape index: {0}]
  %s10 = inlined_call_operand.hbm [shape: f32[8,128], index: 10, kind: output, shape index: {1}]
  %11 = xla_tuple %s9, %s10
  %s12 = sld [smem:[#allocation0]]
  $region74: #{tpu_custom_call.1} parent=0
    _
  %s14 = ssub.s32 1, %s12
  %s15 = scalar_select 0, %s14, %s12
  $region1: #{tpu_custom_call.1} parent=0
    #allocation2 [shape = 'u8[4096]{0}', space=vmem, size = 0x1000, scoped, tag = 'input window, operand 0, single buffered']
    #allocation3 [shape = 's32[1]{0}', space=sflag, size = 0x4, scoped, tag = 'scoped memory for tpu_custom_call.1']
    #allocation4 [shape = 's32[1]{0}', space=sflag, size = 0x4, scoped, tag = 'scoped memory for tpu_custom_call.1']
    #allocation5 [shape = 'u8[65536]{0}', space=vmem, size = 0x10000, scoped, tag = 'input window, operand 1, single buffered']
    #allocation6 [shape = 's32[1]{0}', space=sflag, size = 0x4, scoped, tag = 'scoped memory for tpu_custom_call.1']
    #allocation7 [shape = 'u8[65536]{0}', space=vmem, size = 0x10000, scoped, tag = 'input window, operand 3, single buffered']
    #allocation8 [shape = 'u8[65536]{0}', space=vmem, size = 0x10000, scoped, tag = 'input window, operand 5, single buffered']
    #allocation9 [shape = 's32[1]{0}', space=sflag, size = 0x4, scoped, tag = 'scoped memory for tpu_custom_call.1']
    #allocation10 [shape = 'u8[65536]{0}', space=vmem, size = 0x10000, scoped, tag = 'input window, operand 7, single buffered']
    #allocation11 [shape = 'u8[4096]{0}', space=vmem, size = 0x1000, scoped, tag = 'output window, operand 0, single buffered']
    #allocation12 [shape = 'u8[4096]{0}', space=vmem, size = 0x1000, scoped, tag = 'output window, operand 1, single buffered']
    #allocation13 [shape = 's32[1]{0}', space=sflag, size = 0x4, scoped, tag = 'scoped memory for tpu_custom_call.1']
    %16 = vsyncpa [#allocation3], 0
    %17 = vsyncpa [#allocation6], 0
    %18 = vsyncpa [#allocation9], 0
    %19 = vsyncpa [#allocation4], 0
    %20 = vsyncpa [#allocation13], 0
    // Predicated region
    $region2: #{tpu_custom_call.1} parent=1 // pred_check
      _
    $region3: #{tpu_custom_call.1} parent=1 // pred_check_branch
      %22 = sbr.rel (0) target = $region5
    $region4: #{tpu_custom_call.1} parent=1 // pred_region
      %s24 = ssub.s32 128, 128
      %25 = vsyncadd [#allocation3], %s24
      %s27 = sshll.u32 [#allocation2], 4
      %s28 = int_to_ptr.vmem [resolvable:$true] %s27
      %30 = dma.hbm_to_vmem [thread:$0]  %s0, 128, %s28, [#allocation3]
    $region5: #{tpu_custom_call.1} parent=1 // pred_fallthru
      _
    // Predicated region
    $region6: #{tpu_custom_call.1} parent=1 // pred_check
      _
    $region7: #{tpu_custom_call.1} parent=1 // pred_check_branch
      %32 = sbr.rel (0) target = $region9
    $region8: #{tpu_custom_call.1} parent=1 // pred_region
      %s34 = ssub.s32 2048, 2048
      %35 = vsyncadd [#allocation6], %s34
      %s36 = sshll.u32 [#allocation5], 4
      %s37 = int_to_ptr.vmem [resolvable:$true] %s36
      %42 = dma.hbm_to_vmem [thread:$0]  %s1, 2048, %s37, [#allocation6], 128, 128, 8
    $region9: #{tpu_custom_call.1} parent=1 // pred_fallthru
      _
    // Predicated region
    $region10: #{tpu_custom_call.1} parent=1 // pred_check
      _
    $region11: #{tpu_custom_call.1} parent=1 // pred_check_branch
      %44 = sbr.rel (0) target = $region13
    $region12: #{tpu_custom_call.1} parent=1 // pred_region
      _
    $region13: #{tpu_custom_call.1} parent=1 // pred_fallthru
      _
    // Predicated region
    $region14: #{tpu_custom_call.1} parent=1 // pred_check
      _
    $region15: #{tpu_custom_call.1} parent=1 // pred_check_branch
      %46 = sbr.rel (0) target = $region17
    $region16: #{tpu_custom_call.1} parent=1 // pred_region
      %s48 = ssub.s32 2048, 2048
      %49 = vsyncadd [#allocation6], %s48
      %s50 = sshll.u32 [#allocation7], 4
      %s51 = int_to_ptr.vmem [resolvable:$true] %s50
      %56 = dma.hbm_to_vmem [thread:$0]  %s3, 2048, %s51, [#allocation6], 128, 128, 8
    $region17: #{tpu_custom_call.1} parent=1 // pred_fallthru
      _
    // Predicated region
    $region18: #{tpu_custom_call.1} parent=1 // pred_check
      _
    $region19: #{tpu_custom_call.1} parent=1 // pred_check_branch
      %58 = sbr.rel (0) target = $region21
    $region20: #{tpu_custom_call.1} parent=1 // pred_region
      _
    $region21: #{tpu_custom_call.1} parent=1 // pred_fallthru
      _
    // Predicated region
    $region22: #{tpu_custom_call.1} parent=1 // pred_check
      _
    $region23: #{tpu_custom_call.1} parent=1 // pred_check_branch
      %60 = sbr.rel (0) target = $region25
    $region24: #{tpu_custom_call.1} parent=1 // pred_region
      %s62 = ssub.s32 2048, 2048
      %63 = vsyncadd [#allocation9], %s62
      %s64 = sshll.u32 [#allocation8], 4
      %s65 = int_to_ptr.vmem [resolvable:$true] %s64
      %70 = dma.hbm_to_vmem [thread:$0]  %s5, 2048, %s65, [#allocation9], 128, 128, 8
    $region25: #{tpu_custom_call.1} parent=1 // pred_fallthru
      _
    // Predicated region
    $region26: #{tpu_custom_call.1} parent=1 // pred_check
      _
    $region27: #{tpu_custom_call.1} parent=1 // pred_check_branch
      %72 = sbr.rel (0) target = $region29
    $region28: #{tpu_custom_call.1} parent=1 // pred_region
      _
    $region29: #{tpu_custom_call.1} parent=1 // pred_fallthru
      _
    // Predicated region
    $region30: #{tpu_custom_call.1} parent=1 // pred_check
      _
    $region31: #{tpu_custom_call.1} parent=1 // pred_check_branch
      %74 = sbr.rel (0) target = $region33
    $region32: #{tpu_custom_call.1} parent=1 // pred_region
      %s76 = ssub.s32 2048, 2048
      %77 = vsyncadd [#allocation9], %s76
      %s78 = sshll.u32 [#allocation10], 4
      %s79 = int_to_ptr.vmem [resolvable:$true] %s78
      %84 = dma.hbm_to_vmem [thread:$0]  %s7, 2048, %s79, [#allocation9], 128, 128, 8
    $region33: #{tpu_custom_call.1} parent=1 // pred_fallthru
      _
    // Predicated region
    $region34: #{tpu_custom_call.1} parent=1 // pred_check
      _
    $region35: #{tpu_custom_call.1} parent=1 // pred_check_branch
      %86 = sbr.rel (0) target = $region37
    $region36: #{tpu_custom_call.1} parent=1 // pred_region
      _
    $region37: #{tpu_custom_call.1} parent=1 // pred_fallthru
      _
    // Predicated region
    $region38: #{tpu_custom_call.1} parent=1 // pred_check
      _
    $region39: #{tpu_custom_call.1} parent=1 // pred_check_branch
      %88 = sbr.rel (0) target = $region41
    $region40: #{tpu_custom_call.1} parent=1 // pred_region
      %89 = dma.done [#allocation3], 128
    $region41: #{tpu_custom_call.1} parent=1 // pred_fallthru
      _
    // Predicated region
    $region42: #{tpu_custom_call.1} parent=1 // pred_check
      _
    $region43: #{tpu_custom_call.1} parent=1 // pred_check_branch
      %91 = sbr.rel (0) target = $region45
    $region44: #{tpu_custom_call.1} parent=1 // pred_region
      %92 = dma.done [#allocation6], 2048
    $region45: #{tpu_custom_call.1} parent=1 // pred_fallthru
      _
    // Predicated region
    $region46: #{tpu_custom_call.1} parent=1 // pred_check
      _
    $region47: #{tpu_custom_call.1} parent=1 // pred_check_branch
      %94 = sbr.rel (0) target = $region49
    $region48: #{tpu_custom_call.1} parent=1 // pred_region
      %95 = dma.done [#allocation6], 2048
    $region49: #{tpu_custom_call.1} parent=1 // pred_fallthru
      _
    // Predicated region
    $region50: #{tpu_custom_call.1} parent=1 // pred_check
      _
    $region51: #{tpu_custom_call.1} parent=1 // pred_check_branch
      %97 = sbr.rel (0) target = $region53
    $region52: #{tpu_custom_call.1} parent=1 // pred_region
      %98 = dma.done [#allocation9], 2048
    $region53: #{tpu_custom_call.1} parent=1 // pred_fallthru
      _
    // Predicated region
    $region54: #{tpu_custom_call.1} parent=1 // pred_check
      _
    $region55: #{tpu_custom_call.1} parent=1 // pred_check_branch
      %100 = sbr.rel (0) target = $region57
    $region56: #{tpu_custom_call.1} parent=1 // pred_region
      %101 = dma.done [#allocation9], 2048
    $region57: #{tpu_custom_call.1} parent=1 // pred_fallthru
      _
    %v102 = vld [vmem:[#allocation2] sm:$0xff]
    %v103 = vld [vmem:[#allocation5] sm:$0xff]
    %v104 = vld [vmem:[#allocation5 + $0x8] sm:$0xff]
    %v105 = vld [vmem:[#allocation5 + $0x10] sm:$0xff]
    %v106 = vld [vmem:[#allocation5 + $0x18] sm:$0xff]
    %v107 = vld [vmem:[#allocation5 + $0x20] sm:$0xff]
    %v108 = vld [vmem:[#allocation5 + $0x28] sm:$0xff]
    %v109 = vld [vmem:[#allocation5 + $0x30] sm:$0xff]
    %v110 = vld [vmem:[#allocation5 + $0x38] sm:$0xff]
    %v111 = vld [vmem:[#allocation5 + $0x40] sm:$0xff]
    %v112 = vld [vmem:[#allocation5 + $0x48] sm:$0xff]
    %v113 = vld [vmem:[#allocation5 + $0x50] sm:$0xff]
    %v114 = vld [vmem:[#allocation5 + $0x58] sm:$0xff]
    %v115 = vld [vmem:[#allocation5 + $0x60] sm:$0xff]
    %v116 = vld [vmem:[#allocation5 + $0x68] sm:$0xff]
    %v117 = vld [vmem:[#allocation5 + $0x70] sm:$0xff]
    %v118 = vld [vmem:[#allocation5 + $0x78] sm:$0xff]
    %v119 = vld [vmem:[%s2] sm:$0x1]
    %v121 = vlaneseq
    %v122 = vshrl.u32 %v121, 7
    %v123 = vsub.s32 0, %v122
    %v124 = vrot.slane %v119, %v123
    %126 = vmatprep.subr.mxu0 0.0
    %127 = vmatpush1.msra.mxu0 %v118
    %128 = vmatprep.subr.mxu0 0.0
    %129 = vmatpush1.msra.mxu0 %v117
    %130 = vmatprep.subr.mxu0 0.0
    %131 = vmatpush1.msra.mxu0 %v116
    %132 = vmatprep.subr.mxu0 0.0
    %133 = vmatpush1.msra.mxu0 %v115
    %134 = vmatprep.subr.mxu0 0.0
    %135 = vmatpush1.msra.mxu0 %v114
    %136 = vmatprep.subr.mxu0 0.0
    %137 = vmatpush1.msra.mxu0 %v113
    %138 = vmatprep.subr.mxu0 0.0
    %139 = vmatpush1.msra.mxu0 %v112
    %140 = vmatprep.subr.mxu0 0.0
    %141 = vmatpush1.msra.mxu0 %v111
    %142 = vmatprep.subr.mxu0 0.0
    %143 = vmatpush1.msra.mxu0 %v110
    %144 = vmatprep.subr.mxu0 0.0
    %145 = vmatpush1.msra.mxu0 %v109
    %146 = vmatprep.subr.mxu0 0.0
    %147 = vmatpush1.msra.mxu0 %v108
    %148 = vmatprep.subr.mxu0 0.0
    %149 = vmatpush1.msra.mxu0 %v107
    %150 = vmatprep.subr.mxu0 0.0
    %151 = vmatpush1.msra.mxu0 %v106
    %152 = vmatprep.subr.mxu0 0.0
    %153 = vmatpush1.msra.mxu0 %v105
    %154 = vmatprep.subr.mxu0 0.0
    %155 = vmatpush1.msra.mxu0 %v104
    %156 = vmatprep.subr.mxu0 0.0
    %157 = vmatpush1.msra.mxu0 %v103
    %158 = vmatprep.subr.mxu0 0.0
    %159 = vmatpush2.msra.mxu0 0.0
    %160 = vmatprep.subr.mxu0 0.0
    %161 = vmatpush2.msra.mxu0 0.0
    %162 = vmatprep.subr.mxu0 0.0
    %163 = vmatpush2.msra.mxu0 0.0
    %164 = vmatprep.subr.mxu0 0.0
    %165 = vmatpush2.msra.mxu0 0.0
    %166 = vmatprep.subr.mxu0 0.0
    %167 = vmatpush2.msra.mxu0 0.0
    %168 = vmatprep.subr.mxu0 0.0
    %169 = vmatpush2.msra.mxu0 0.0
    %170 = vmatprep.subr.mxu0 0.0
    %171 = vmatpush2.msra.mxu0 0.0
    %172 = vmatprep.subr.mxu0 0.0
    %173 = vmatpush2.msra.mxu0 0.0
    %174 = vmatprep.subr.mxu0 0.0
    %175 = vmatpush2.msra.mxu0 0.0
    %176 = vmatprep.subr.mxu0 0.0
    %177 = vmatpush2.msra.mxu0 0.0
    %178 = vmatprep.subr.mxu0 0.0
    %179 = vmatpush2.msra.mxu0 0.0
    %180 = vmatprep.subr.mxu0 0.0
    %181 = vmatpush2.msra.mxu0 0.0
    %182 = vmatprep.subr.mxu0 0.0
    %183 = vmatpush2.msra.mxu0 0.0
    %184 = vmatprep.subr.mxu0 0.0
    %185 = vmatpush2.msra.mxu0 0.0
    %186 = vmatprep.subr.mxu0 0.0
    %187 = vmatpush2.msra.mxu0 0.0
    %188 = vmatprep.subr.mxu0 0.0
    %189 = vmatpush2.msra.mxu0 0.0
    %190 = vmatprep.mubr.f32.mxu0 0.0
    %191 = vmatmul.mubr.f32.gmra.mxu0 %v102
    %v192 = vpop.f32.mrf.mxu0
    %v193 = vadd.f32 %v124, %v192
    %v194 = vpop.f32.mrf.mxu0
    %195 = vdwg.mxu0
    %v196 = vmax.f32 %v193, 0.0
    %v197 = vld [vmem:[#allocation7] sm:$0xff]
    %v198 = vld [vmem:[#allocation7 + $0x8] sm:$0xff]
    %v199 = vld [vmem:[#allocation7 + $0x10] sm:$0xff]
    %v200 = vld [vmem:[#allocation7 + $0x18] sm:$0xff]
    %v201 = vld [vmem:[#allocation7 + $0x20] sm:$0xff]
    %v202 = vld [vmem:[#allocation7 + $0x28] sm:$0xff]
    %v203 = vld [vmem:[#allocation7 + $0x30] sm:$0xff]
    %v204 = vld [vmem:[#allocation7 + $0x38] sm:$0xff]
    %v205 = vld [vmem:[#allocation7 + $0x40] sm:$0xff]
    %v206 = vld [vmem:[#allocation7 + $0x48] sm:$0xff]
    %v207 = vld [vmem:[#allocation7 + $0x50] sm:$0xff]
    %v208 = vld [vmem:[#allocation7 + $0x58] sm:$0xff]
    %v209 = vld [vmem:[#allocation7 + $0x60] sm:$0xff]
    %v210 = vld [vmem:[#allocation7 + $0x68] sm:$0xff]
    %v211 = vld [vmem:[#allocation7 + $0x70] sm:$0xff]
    %v212 = vld [vmem:[#allocation7 + $0x78] sm:$0xff]
    %v213 = vld [vmem:[%s4] sm:$0x1]
    %v215 = vlaneseq
    %v216 = vshrl.u32 %v215, 7
    %v217 = vsub.s32 0, %v216
    %v218 = vrot.slane %v213, %v217
    %220 = vmatprep.subr.mxu0 0.0
    %221 = vmatpush1.msra.mxu0 %v212
    %222 = vmatprep.subr.mxu0 0.0
    %223 = vmatpush1.msra.mxu0 %v211
    %224 = vmatprep.subr.mxu0 0.0
    %225 = vmatpush1.msra.mxu0 %v210
    %226 = vmatprep.subr.mxu0 0.0
    %227 = vmatpush1.msra.mxu0 %v209
    %228 = vmatprep.subr.mxu0 0.0
    %229 = vmatpush1.msra.mxu0 %v208
    %230 = vmatprep.subr.mxu0 0.0
    %231 = vmatpush1.msra.mxu0 %v207
    %232 = vmatprep.subr.mxu0 0.0
    %233 = vmatpush1.msra.mxu0 %v206
    %234 = vmatprep.subr.mxu0 0.0
    %235 = vmatpush1.msra.mxu0 %v205
    %236 = vmatprep.subr.mxu0 0.0
    %237 = vmatpush1.msra.mxu0 %v204
    %238 = vmatprep.subr.mxu0 0.0
    %239 = vmatpush1.msra.mxu0 %v203
    %240 = vmatprep.subr.mxu0 0.0
    %241 = vmatpush1.msra.mxu0 %v202
    %242 = vmatprep.subr.mxu0 0.0
    %243 = vmatpush1.msra.mxu0 %v201
    %244 = vmatprep.subr.mxu0 0.0
    %245 = vmatpush1.msra.mxu0 %v200
    %246 = vmatprep.subr.mxu0 0.0
    %247 = vmatpush1.msra.mxu0 %v199
    %248 = vmatprep.subr.mxu0 0.0
    %249 = vmatpush1.msra.mxu0 %v198
    %250 = vmatprep.subr.mxu0 0.0
    %251 = vmatpush1.msra.mxu0 %v197
    %252 = vmatprep.subr.mxu0 0.0
    %253 = vmatpush2.msra.mxu0 0.0
    %254 = vmatprep.subr.mxu0 0.0
    %255 = vmatpush2.msra.mxu0 0.0
    %256 = vmatprep.subr.mxu0 0.0
    %257 = vmatpush2.msra.mxu0 0.0
    %258 = vmatprep.subr.mxu0 0.0
    %259 = vmatpush2.msra.mxu0 0.0
    %260 = vmatprep.subr.mxu0 0.0
    %261 = vmatpush2.msra.mxu0 0.0
    %262 = vmatprep.subr.mxu0 0.0
    %263 = vmatpush2.msra.mxu0 0.0
    %264 = vmatprep.subr.mxu0 0.0
    %265 = vmatpush2.msra.mxu0 0.0
    %266 = vmatprep.subr.mxu0 0.0
    %267 = vmatpush2.msra.mxu0 0.0
    %268 = vmatprep.subr.mxu0 0.0
    %269 = vmatpush2.msra.mxu0 0.0
    %270 = vmatprep.subr.mxu0 0.0
    %271 = vmatpush2.msra.mxu0 0.0
    %272 = vmatprep.subr.mxu0 0.0
    %273 = vmatpush2.msra.mxu0 0.0
    %274 = vmatprep.subr.mxu0 0.0
    %275 = vmatpush2.msra.mxu0 0.0
    %276 = vmatprep.subr.mxu0 0.0
    %277 = vmatpush2.msra.mxu0 0.0
    %278 = vmatprep.subr.mxu0 0.0
    %279 = vmatpush2.msra.mxu0 0.0
    %280 = vmatprep.subr.mxu0 0.0
    %281 = vmatpush2.msra.mxu0 0.0
    %282 = vmatprep.subr.mxu0 0.0
    %283 = vmatpush2.msra.mxu0 0.0
    %284 = vmatprep.mubr.f32.mxu0 0.0
    %285 = vmatmul.mubr.f32.gmra.mxu0 %v196
    %v286 = vpop.f32.mrf.mxu0
    %v287 = vadd.f32 %v218, %v286
    %v288 = vpop.f32.mrf.mxu0
    %289 = vdwg.mxu0
    %v290 = vld [vmem:[#allocation8] sm:$0xff]
    %v291 = vld [vmem:[#allocation8 + $0x8] sm:$0xff]
    %v292 = vld [vmem:[#allocation8 + $0x10] sm:$0xff]
    %v293 = vld [vmem:[#allocation8 + $0x18] sm:$0xff]
    %v294 = vld [vmem:[#allocation8 + $0x20] sm:$0xff]
    %v295 = vld [vmem:[#allocation8 + $0x28] sm:$0xff]
    %v296 = vld [vmem:[#allocation8 + $0x30] sm:$0xff]
    %v297 = vld [vmem:[#allocation8 + $0x38] sm:$0xff]
    %v298 = vld [vmem:[#allocation8 + $0x40] sm:$0xff]
    %v299 = vld [vmem:[#allocation8 + $0x48] sm:$0xff]
    %v300 = vld [vmem:[#allocation8 + $0x50] sm:$0xff]
    %v301 = vld [vmem:[#allocation8 + $0x58] sm:$0xff]
    %v302 = vld [vmem:[#allocation8 + $0x60] sm:$0xff]
    %v303 = vld [vmem:[#allocation8 + $0x68] sm:$0xff]
    %v304 = vld [vmem:[#allocation8 + $0x70] sm:$0xff]
    %v305 = vld [vmem:[#allocation8 + $0x78] sm:$0xff]
    %v306 = vld [vmem:[%s6] sm:$0x1]
    %v308 = vlaneseq
    %v309 = vshrl.u32 %v308, 7
    %v310 = vsub.s32 0, %v309
    %v311 = vrot.slane %v306, %v310
    %313 = vmatprep.subr.mxu0 0.0
    %314 = vmatpush1.msra.mxu0 %v305
    %315 = vmatprep.subr.mxu0 0.0
    %316 = vmatpush1.msra.mxu0 %v304
    %317 = vmatprep.subr.mxu0 0.0
    %318 = vmatpush1.msra.mxu0 %v303
    %319 = vmatprep.subr.mxu0 0.0
    %320 = vmatpush1.msra.mxu0 %v302
    %321 = vmatprep.subr.mxu0 0.0
    %322 = vmatpush1.msra.mxu0 %v301
    %323 = vmatprep.subr.mxu0 0.0
    %324 = vmatpush1.msra.mxu0 %v300
    %325 = vmatprep.subr.mxu0 0.0
    %326 = vmatpush1.msra.mxu0 %v299
    %327 = vmatprep.subr.mxu0 0.0
    %328 = vmatpush1.msra.mxu0 %v298
    %329 = vmatprep.subr.mxu0 0.0
    %330 = vmatpush1.msra.mxu0 %v297
    %331 = vmatprep.subr.mxu0 0.0
    %332 = vmatpush1.msra.mxu0 %v296
    %333 = vmatprep.subr.mxu0 0.0
    %334 = vmatpush1.msra.mxu0 %v295
    %335 = vmatprep.subr.mxu0 0.0
    %336 = vmatpush1.msra.mxu0 %v294
    %337 = vmatprep.subr.mxu0 0.0
    %338 = vmatpush1.msra.mxu0 %v293
    %339 = vmatprep.subr.mxu0 0.0
    %340 = vmatpush1.msra.mxu0 %v292
    %341 = vmatprep.subr.mxu0 0.0
    %342 = vmatpush1.msra.mxu0 %v291
    %343 = vmatprep.subr.mxu0 0.0
    %344 = vmatpush1.msra.mxu0 %v290
    %345 = vmatprep.subr.mxu0 0.0
    %346 = vmatpush2.msra.mxu0 0.0
    %347 = vmatprep.subr.mxu0 0.0
    %348 = vmatpush2.msra.mxu0 0.0
    %349 = vmatprep.subr.mxu0 0.0
    %350 = vmatpush2.msra.mxu0 0.0
    %351 = vmatprep.subr.mxu0 0.0
    %352 = vmatpush2.msra.mxu0 0.0
    %353 = vmatprep.subr.mxu0 0.0
    %354 = vmatpush2.msra.mxu0 0.0
    %355 = vmatprep.subr.mxu0 0.0
    %356 = vmatpush2.msra.mxu0 0.0
    %357 = vmatprep.subr.mxu0 0.0
    %358 = vmatpush2.msra.mxu0 0.0
    %359 = vmatprep.subr.mxu0 0.0
    %360 = vmatpush2.msra.mxu0 0.0
    %361 = vmatprep.subr.mxu0 0.0
    %362 = vmatpush2.msra.mxu0 0.0
    %363 = vmatprep.subr.mxu0 0.0
    %364 = vmatpush2.msra.mxu0 0.0
    %365 = vmatprep.subr.mxu0 0.0
    %366 = vmatpush2.msra.mxu0 0.0
    %367 = vmatprep.subr.mxu0 0.0
    %368 = vmatpush2.msra.mxu0 0.0
    %369 = vmatprep.subr.mxu0 0.0
    %370 = vmatpush2.msra.mxu0 0.0
    %371 = vmatprep.subr.mxu0 0.0
    %372 = vmatpush2.msra.mxu0 0.0
    %373 = vmatprep.subr.mxu0 0.0
    %374 = vmatpush2.msra.mxu0 0.0
    %375 = vmatprep.subr.mxu0 0.0
    %376 = vmatpush2.msra.mxu0 0.0
    %377 = vmatprep.mubr.f32.mxu0 0.0
    %378 = vmatmul.mubr.f32.gmra.mxu0 %v287
    %v379 = vpop.f32.mrf.mxu0
    %v380 = vadd.f32 %v311, %v379
    %v381 = vpop.f32.mrf.mxu0
    %382 = vdwg.mxu0
    %v383 = vmax.f32 %v380, 0.0
    %v384 = vld [vmem:[#allocation10] sm:$0xff]
    %v385 = vld [vmem:[#allocation10 + $0x8] sm:$0xff]
    %v386 = vld [vmem:[#allocation10 + $0x10] sm:$0xff]
    %v387 = vld [vmem:[#allocation10 + $0x18] sm:$0xff]
    %v388 = vld [vmem:[#allocation10 + $0x20] sm:$0xff]
    %v389 = vld [vmem:[#allocation10 + $0x28] sm:$0xff]
    %v390 = vld [vmem:[#allocation10 + $0x30] sm:$0xff]
    %v391 = vld [vmem:[#allocation10 + $0x38] sm:$0xff]
    %v392 = vld [vmem:[#allocation10 + $0x40] sm:$0xff]
    %v393 = vld [vmem:[#allocation10 + $0x48] sm:$0xff]
    %v394 = vld [vmem:[#allocation10 + $0x50] sm:$0xff]
    %v395 = vld [vmem:[#allocation10 + $0x58] sm:$0xff]
    %v396 = vld [vmem:[#allocation10 + $0x60] sm:$0xff]
    %v397 = vld [vmem:[#allocation10 + $0x68] sm:$0xff]
    %v398 = vld [vmem:[#allocation10 + $0x70] sm:$0xff]
    %v399 = vld [vmem:[#allocation10 + $0x78] sm:$0xff]
    %v400 = vld [vmem:[%s8] sm:$0x1]
    %v402 = vlaneseq
    %v403 = vshrl.u32 %v402, 7
    %v404 = vsub.s32 0, %v403
    %v405 = vrot.slane %v400, %v404
    %407 = vmatprep.subr.mxu0 0.0
    %408 = vmatpush1.msra.mxu0 %v399
    %409 = vmatprep.subr.mxu0 0.0
    %410 = vmatpush1.msra.mxu0 %v398
    %411 = vmatprep.subr.mxu0 0.0
    %412 = vmatpush1.msra.mxu0 %v397
    %413 = vmatprep.subr.mxu0 0.0
    %414 = vmatpush1.msra.mxu0 %v396
    %415 = vmatprep.subr.mxu0 0.0
    %416 = vmatpush1.msra.mxu0 %v395
    %417 = vmatprep.subr.mxu0 0.0
    %418 = vmatpush1.msra.mxu0 %v394
    %419 = vmatprep.subr.mxu0 0.0
    %420 = vmatpush1.msra.mxu0 %v393
    %421 = vmatprep.subr.mxu0 0.0
    %422 = vmatpush1.msra.mxu0 %v392
    %423 = vmatprep.subr.mxu0 0.0
    %424 = vmatpush1.msra.mxu0 %v391
    %425 = vmatprep.subr.mxu0 0.0
    %426 = vmatpush1.msra.mxu0 %v390
    %427 = vmatprep.subr.mxu0 0.0
    %428 = vmatpush1.msra.mxu0 %v389
    %429 = vmatprep.subr.mxu0 0.0
    %430 = vmatpush1.msra.mxu0 %v388
    %431 = vmatprep.subr.mxu0 0.0
    %432 = vmatpush1.msra.mxu0 %v387
    %433 = vmatprep.subr.mxu0 0.0
    %434 = vmatpush1.msra.mxu0 %v386
    %435 = vmatprep.subr.mxu0 0.0
    %436 = vmatpush1.msra.mxu0 %v385
    %437 = vmatprep.subr.mxu0 0.0
    %438 = vmatpush1.msra.mxu0 %v384
    %439 = vmatprep.subr.mxu0 0.0
    %440 = vmatpush2.msra.mxu0 0.0
    %441 = vmatprep.subr.mxu0 0.0
    %442 = vmatpush2.msra.mxu0 0.0
    %443 = vmatprep.subr.mxu0 0.0
    %444 = vmatpush2.msra.mxu0 0.0
    %445 = vmatprep.subr.mxu0 0.0
    %446 = vmatpush2.msra.mxu0 0.0
    %447 = vmatprep.subr.mxu0 0.0
    %448 = vmatpush2.msra.mxu0 0.0
    %449 = vmatprep.subr.mxu0 0.0
    %450 = vmatpush2.msra.mxu0 0.0
    %451 = vmatprep.subr.mxu0 0.0
    %452 = vmatpush2.msra.mxu0 0.0
    %453 = vmatprep.subr.mxu0 0.0
    %454 = vmatpush2.msra.mxu0 0.0
    %455 = vmatprep.subr.mxu0 0.0
    %456 = vmatpush2.msra.mxu0 0.0
    %457 = vmatprep.subr.mxu0 0.0
    %458 = vmatpush2.msra.mxu0 0.0
    %459 = vmatprep.subr.mxu0 0.0
    %460 = vmatpush2.msra.mxu0 0.0
    %461 = vmatprep.subr.mxu0 0.0
    %462 = vmatpush2.msra.mxu0 0.0
    %463 = vmatprep.subr.mxu0 0.0
    %464 = vmatpush2.msra.mxu0 0.0
    %465 = vmatprep.subr.mxu0 0.0
    %466 = vmatpush2.msra.mxu0 0.0
    %467 = vmatprep.subr.mxu0 0.0
    %468 = vmatpush2.msra.mxu0 0.0
    %469 = vmatprep.subr.mxu0 0.0
    %470 = vmatpush2.msra.mxu0 0.0
    %471 = vmatprep.mubr.f32.mxu0 0.0
    %472 = vmatmul.mubr.f32.gmra.mxu0 %v383
    %v473 = vpop.f32.mrf.mxu0
    %v474 = vadd.f32 %v405, %v473
    %v475 = vpop.f32.mrf.mxu0
    %476 = vdwg.mxu0
    %477 = vst [vmem:[#allocation11] sm:$0xff] %v287
    %478 = vst [vmem:[#allocation12] sm:$0xff] %v474
    // Predicated region
    $region58: #{tpu_custom_call.1} parent=1 // pred_check
      _
    $region59: #{tpu_custom_call.1} parent=1 // pred_check_branch
      %480 = sbr.rel (0) target = $region61
    $region60: #{tpu_custom_call.1} parent=1 // pred_region
      %s482 = ssub.s32 128, 128
      %483 = vsyncadd [#allocation4], %s482
      %s485 = sshll.u32 [#allocation11], 4
      %s486 = int_to_ptr.vmem [resolvable:$true] %s485
      %488 = dma.vmem_to_hbm [thread:$0]  %s486, 128, %s9, [#allocation4]
    $region61: #{tpu_custom_call.1} parent=1 // pred_fallthru
      _
    // Predicated region
    $region62: #{tpu_custom_call.1} parent=1 // pred_check
      _
    $region63: #{tpu_custom_call.1} parent=1 // pred_check_branch
      %490 = sbr.rel (0) target = $region65
    $region64: #{tpu_custom_call.1} parent=1 // pred_region
      %s492 = ssub.s32 128, 128
      %493 = vsyncadd [#allocation13], %s492
      %s495 = sshll.u32 [#allocation12], 4
      %s496 = int_to_ptr.vmem [resolvable:$true] %s495
      %498 = dma.vmem_to_hbm [thread:$0]  %s496, 128, %s10, [#allocation13]
    $region65: #{tpu_custom_call.1} parent=1 // pred_fallthru
      _
    // Predicated region
    $region66: #{tpu_custom_call.1} parent=1 // pred_check
      _
    $region67: #{tpu_custom_call.1} parent=1 // pred_check_branch
      %500 = sbr.rel (0) target = $region69
    $region68: #{tpu_custom_call.1} parent=1 // pred_region
      %501 = dma.done [#allocation4], 128
    $region69: #{tpu_custom_call.1} parent=1 // pred_fallthru
      _
    // Predicated region
    $region70: #{tpu_custom_call.1} parent=1 // pred_check
      _
    $region71: #{tpu_custom_call.1} parent=1 // pred_check_branch
      %503 = sbr.rel (0) target = $region73
    $region72: #{tpu_custom_call.1} parent=1 // pred_region
      %504 = dma.done [#allocation13], 128
    $region73: #{tpu_custom_call.1} parent=1 // pred_fallthru
      _
    %505 = vsyncpa [#allocation3], 1
    %506 = vsyncpa [#allocation6], 1
    %507 = vsyncpa [#allocation9], 1
    %508 = vsyncpa [#allocation4], 1
    %509 = vsyncpa [#allocation13], 1

</llo_original>
